<compile_context>
chip_gen: v7x
topology: tpu7x:2x2x1
jax: 0.10.0
libtpu: 0.0.40
codegen_flags: <defaults>
</compile_context>

<pallas_src>
import functools

import jax
import jax.numpy as jnp
from jax.experimental import pallas as pl
from jax.experimental.pallas import tpu as pltpu

NEG_SLOPE = 0.01   # nn.LeakyReLU default negative_slope
HIDDEN = 256       # fc1 output width fixed by the module
LANE = 128


def _leaky_relu(v):
    return jnp.where(v >= 0, v, NEG_SLOPE * v)


def classifier_kernel(x_ref, w1_ref, b1_ref, w2_ref, b2_ref, o_ref, acc_ref, *,
                      ts, fold, s_true, num_s_tiles, inv_s, needs_mask):
    j = pl.program_id(1)          # spatial (reduction) grid axis
    last = num_s_tiles - 1        # static

    @pl.when(j == 0)
    def _():
        acc_ref[...] = jnp.zeros_like(acc_ref)

    def tile_sum(tail):
        # Fold the (tn, c, ts) tile down to (tn, c, fold) inside vregs using
        # static lane-chunk slices + VPU adds.  This keeps accumulator VMEM
        # load/store traffic small (ts/fold reduction) so the kernel stays
        # purely HBM-DMA bound, and the adds hide under the x DMA stream.
        chunks = ts // fold
        base = last * ts if tail else 0          # static tile origin
        npar = min(8, chunks)
        partial = [None] * npar                  # a few chains for VPU ILP
        for k in range(chunks):
            lo = base + k * fold
            if tail and lo >= s_true:
                continue                         # chunk entirely past true S
            chunk = x_ref[:, :, k * fold:(k + 1) * fold].astype(jnp.float32)
            if tail and lo + fold > s_true:
                # Straddling chunk: zero the out-of-range lanes.  This replaces
                # the old wrapper-side jnp.pad (which cost an extra HBM pass).
                lane = jax.lax.broadcasted_iota(jnp.int32, chunk.shape, 2)
                chunk = jnp.where(lane < (s_true - lo), chunk, 0.0)
            slot = k % npar
            partial[slot] = chunk if partial[slot] is None else partial[slot] + chunk
        total = None
        for p in partial:
            if p is not None:
                total = p if total is None else total + p
        return total

    if needs_mask:
        @pl.when(j == last)
        def _():
            acc_ref[...] += tile_sum(True)

        @pl.when(j != last)
        def _():
            acc_ref[...] += tile_sum(False)
    else:
        acc_ref[...] += tile_sum(False)

    @pl.when(j == last)
    def _():
        # Single cross-lane reduce + scale by 1 / (true D*H*W), then the tiny
        # fc1/fc2 + LeakyReLU epilogue (lane-padded output, dense vst).
        pooled = jnp.sum(acc_ref[...], axis=-1) * inv_s                   # (tn, C)
        h = jnp.dot(pooled, w1_ref[...],
                    preferred_element_type=jnp.float32) + b1_ref[...]     # (tn, 256)
        h = _leaky_relu(h)
        o = jnp.dot(h, w2_ref[...],
                    preferred_element_type=jnp.float32) + b2_ref[...]     # (tn, out_pad)
        o_ref[...] = _leaky_relu(o).astype(o_ref.dtype)


@functools.lru_cache(maxsize=None)
def _vmem_limit_default():
    """Generation-aware scoped-VMEM limit (~96 MiB on 128 MiB chips, ~48 MiB on v7x)."""
    try:
        cap = int(pltpu.get_tpu_info().vmem_capacity_bytes)
    except Exception:
        cap = 64 << 20                      # v7x-safe fallback
    return max(32 << 20, min(cap * 3 // 4, 112 << 20))


def _plan_tiling(n, c, s, elem_bytes, tile_budget):
    """Choose (tn, ts, fold, needs_mask): batch rows / spatial lanes per grid
    step and the folded-accumulator width."""
    target = 6 << 20        # aim ~6 MiB of x per grid step (step overhead ~0.35us)
    max_chunks = 512        # bound on the statically unrolled lane-chunk loop

    if s <= 2048:
        # One lane block spans the whole spatial extent (block dim == array dim,
        # so no 128-alignment and no tail mask needed).
        ts = s
        fold = LANE if s % LANE == 0 else s
    else:
        fold = LANE
        s_pad = -(-s // LANE) * LANE
        ts = (target // max(n * c * elem_bytes, 1)) // LANE * LANE
        ts = int(min(max(ts, LANE), s_pad, max_chunks * LANE))

    per_row = c * (2 * ts * elem_bytes + fold * 4)   # x double-buffer + f32 acc
    tn = n
    if n > 8 and tn * per_row > tile_budget:
        # Large N*C: tile the batch (multiples of 8 for the output block) rather
        # than shrinking the contiguous DMA row length toward the 128 floor.
        tn = min(n, max(8, (tile_budget // per_row) // 8 * 8))
    while tn * per_row > tile_budget and fold == LANE and ts > LANE:
        ts = max(LANE, (ts // 2) // LANE * LANE)
        per_row = c * (2 * ts * elem_bytes + fold * 4)

    needs_mask = (s % ts) != 0
    return tn, ts, fold, needs_mask


@functools.partial(jax.jit, static_argnames=("nb_classes",))
def classifier_forward(x5d, w1, b1, w2, b2, *, nb_classes):
    # x5d: (N, C, D, H, W) — flatten spatial dims (free reshape, plain JAX glue).
    n, c, d, h, w = x5d.shape
    s = d * h * w
    x = x5d.reshape(n, c, s)
    eb = jnp.dtype(x.dtype).itemsize

    # Lane-dense output: pad nb_classes up to a multiple of 128 with zero weight
    # columns / bias entries (extra outputs are exactly 0), slice after.
    out_pad = -(-nb_classes // LANE) * LANE
    w2p = jnp.pad(w2, ((0, 0), (0, out_pad - nb_classes)))
    b2p = jnp.pad(b2, ((0, out_pad - nb_classes),)).reshape(1, out_pad)
    b1_2d = b1.reshape(1, HIDDEN)

    vmem_limit = _vmem_limit_default()
    weights_bytes = 2 * 4 * (c * HIDDEN + HIDDEN + HIDDEN * out_pad + out_pad)
    tile_budget = max(vmem_limit - weights_bytes - (8 << 20), 4 << 20)
    tn, ts, fold, needs_mask = _plan_tiling(n, c, s, eb, tile_budget)

    step_bytes = tn * c * (2 * ts * eb + fold * 4)
    out_bytes = 2 * tn * out_pad * 4
    # Last-resort: make sure the minimal tiling actually fits the declared limit.
    vmem_limit = max(vmem_limit, step_bytes + weights_bytes + out_bytes + (8 << 20))

    num_n = pl.cdiv(n, tn)
    num_s = pl.cdiv(s, ts)

    kernel = functools.partial(
        classifier_kernel, ts=ts, fold=fold, s_true=s, num_s_tiles=num_s,
        inv_s=1.0 / float(s), needs_mask=needs_mask)

    flops = n * c * s + 2 * n * c * HIDDEN + 2 * n * HIDDEN * out_pad
    bytes_accessed = (n * c * s * eb
                      + (c * HIDDEN + HIDDEN + HIDDEN * out_pad + out_pad) * 4
                      + n * out_pad * 4)

    out = pl.pallas_call(
        kernel,
        out_shape=jax.ShapeDtypeStruct((n, out_pad), jnp.float32),
        grid_spec=pltpu.PrefetchScalarGridSpec(
            num_scalar_prefetch=0,
            grid=(num_n, num_s),
            in_specs=[
                pl.BlockSpec((tn, c, ts), lambda i, j: (i, 0, j)),     # x tile (pipelined)
                pl.BlockSpec((c, HIDDEN), lambda i, j: (0, 0)),        # w1 (resident)
                pl.BlockSpec((1, HIDDEN), lambda i, j: (0, 0)),        # b1
                pl.BlockSpec((HIDDEN, out_pad), lambda i, j: (0, 0)),  # w2 (padded)
                pl.BlockSpec((1, out_pad), lambda i, j: (0, 0)),       # b2 (padded)
            ],
            out_specs=pl.BlockSpec((tn, out_pad), lambda i, j: (i, 0)),
            scratch_shapes=[pltpu.VMEM((tn, c, fold), jnp.float32)],   # folded running sum
        ),
        compiler_params=pltpu.CompilerParams(
            dimension_semantics=("parallel", "arbitrary"),   # batch || , spatial = reduction
            vmem_limit_bytes=int(vmem_limit),
        ),
        cost_estimate=pl.CostEstimate(
            flops=flops, transcendentals=0, bytes_accessed=bytes_accessed),
    )(x, w1, b1_2d, w2p, b2p)

    out = out[:, :nb_classes]
    # torch .squeeze(1): removes dim 1 only if it is size 1
    if nb_classes == 1:
        out = out.reshape(n)
    return out


def init_params(key, features, nb_classes):
    # Deterministic synthetic init (shapes match nn.Linear weights, stored
    # transposed as (in, out) for row-major matmul inside the kernel).
    k1, k2, k3, k4 = jax.random.split(key, 4)
    s1 = 1.0 / jnp.sqrt(features)
    s2 = 1.0 / jnp.sqrt(256.0)
    w1 = jax.random.uniform(k1, (features, HIDDEN), jnp.float32, -s1, s1)
    b1 = jax.random.uniform(k2, (HIDDEN,), jnp.float32, -s1, s1)
    w2 = jax.random.uniform(k3, (HIDDEN, nb_classes), jnp.float32, -s2, s2)
    b2 = jax.random.uniform(k4, (nb_classes,), jnp.float32, -s2, s2)
    return w1, b1, w2, b2


def _ref_forward(x5d, w1, b1, w2, b2, nb_classes):
    n, c = x5d.shape[:2]
    pooled = jnp.mean(x5d.reshape(n, c, -1), axis=-1)
    h = pooled @ w1 + b1
    h = jnp.where(h >= 0, h, NEG_SLOPE * h)
    o = h @ w2 + b2
    o = jnp.where(o >= 0, o, NEG_SLOPE * o)
    if nb_classes == 1:
        o = o.reshape(n)
    return o


if __name__ == "__main__":
    key = jax.random.PRNGKey(0)

    # Case 1: small shapes (single block), nb_classes == 1 -> squeeze -> (N,)
    N, features, D, H, W, nb_classes = 2, 32, 4, 4, 4, 1
    kx, kp, key = jax.random.split(key, 3)
    x = jax.random.normal(kx, (N, features, D, H, W), jnp.float32)
    params = init_params(kp, features, nb_classes)
    out = jax.block_until_ready(
        classifier_forward(x, *params, nb_classes=nb_classes))
    ref = _ref_forward(x, *params, nb_classes)
    assert out.shape == ref.shape
    assert jnp.allclose(out, ref, atol=1e-4, rtol=1e-4)

    # Case 2: larger spatial extent (S = 24*24*25 = 14400) — exercises the
    # multi-tile streaming path, the in-kernel tail mask (S is not a multiple
    # of the spatial tile), the folded accumulator, and nb_classes > 1.
    N2, features2, D2, H2, W2, nb2 = 2, 64, 24, 24, 25, 3
    kx2, kp2, key = jax.random.split(key, 3)
    x2 = jax.random.normal(kx2, (N2, features2, D2, H2, W2), jnp.float32)
    params2 = init_params(kp2, features2, nb2)
    out2 = jax.block_until_ready(
        classifier_forward(x2, *params2, nb_classes=nb2))
    ref2 = _ref_forward(x2, *params2, nb2)
    assert out2.shape == ref2.shape
    assert jnp.allclose(out2, ref2, atol=1e-4, rtol=1e-4)

    print("KERNEL_OK")
</pallas_src>

<mosaic_0001>
module attributes {stable_mosaic.version = 11 : i64} {
  func.func @classifier_kernel(%arg0: i32, %arg1: i32, %arg2: memref<2x32x64xf32, #tpu.memory_space<vmem>>, %arg3: memref<32x256xf32, #tpu.memory_space<vmem>>, %arg4: memref<1x256xf32, #tpu.memory_space<vmem>>, %arg5: memref<256x128xf32, #tpu.memory_space<vmem>>, %arg6: memref<1x128xf32, #tpu.memory_space<vmem>>, %arg7: memref<2x128xf32, #tpu.memory_space<vmem>>, %arg8: memref<2x32x64xf32, #tpu.memory_space<vmem>>) attributes {dimension_semantics = [#tpu.dimension_semantics<parallel>, #tpu.dimension_semantics<arbitrary>], iteration_bounds = array<i64: 1, 1>, scalar_prefetch = 0 : i64, scratch_operands = 1 : i64, tpu.core_type = #tpu.core_type<tc>, window_params = [{transform_indices = @transform_0, window_bounds = array<i64: 2, 32, 64>}, {pipeline_mode = #tpu.pipeline_mode<synchronous>, transform_indices = @transform_1, window_bounds = array<i64: 32, 256>}, {pipeline_mode = #tpu.pipeline_mode<synchronous>, transform_indices = @transform_2, window_bounds = array<i64: 1, 256>}, {pipeline_mode = #tpu.pipeline_mode<synchronous>, transform_indices = @transform_3, window_bounds = array<i64: 256, 128>}, {pipeline_mode = #tpu.pipeline_mode<synchronous>, transform_indices = @transform_4, window_bounds = array<i64: 1, 128>}, {transform_indices = @transform_5, window_bounds = array<i64: 2, 128>}]} {
    %c0_i32 = arith.constant 0 : i32
    %0 = arith.cmpi eq, %arg1, %c0_i32 : i32
    %1 = arith.extui %0 : i1 to i32
    %c0_i32_0 = arith.constant 0 : i32
    %2 = arith.cmpi ne, %1, %c0_i32_0 : i32
    scf.if %2 {
      %cst = arith.constant 0.000000e+00 : f32
      %10 = vector.broadcast %cst : f32 to vector<2x32x64xf32>
      %c0_11 = arith.constant 0 : index
      %c0_12 = arith.constant 0 : index
      %c0_13 = arith.constant 0 : index
      %11 = vector.load %arg8[%c0_11, %c0_12, %c0_13] : memref<2x32x64xf32, #tpu.memory_space<vmem>>, vector<2x32x64xf32>
      tpu.vector_store %arg8[%c0_11, %c0_12, %c0_13], %10 {strides = array<i32>} : memref<2x32x64xf32, #tpu.memory_space<vmem>>, vector<2x32x64xf32>,
    } else {
    }
    %c0 = arith.constant 0 : index
    %c0_1 = arith.constant 0 : index
    %c0_2 = arith.constant 0 : index
    %3 = vector.load %arg8[%c0, %c0_1, %c0_2] : memref<2x32x64xf32, #tpu.memory_space<vmem>>, vector<2x32x64xf32>
    %c0_3 = arith.constant 0 : index
    %c0_4 = arith.constant 0 : index
    %c0_5 = arith.constant 0 : index
    %4 = vector.load %arg2[%c0_3, %c0_4, %c0_5] : memref<2x32x64xf32, #tpu.memory_space<vmem>>, vector<2x32x64xf32>
    %5 = arith.addf %3, %4 : vector<2x32x64xf32>
    %c0_6 = arith.constant 0 : index
    %c0_7 = arith.constant 0 : index
    %c0_8 = arith.constant 0 : index
    %6 = vector.load %arg8[%c0_6, %c0_7, %c0_8] : memref<2x32x64xf32, #tpu.memory_space<vmem>>, vector<2x32x64xf32>
    tpu.vector_store %arg8[%c0_6, %c0_7, %c0_8], %5 {strides = array<i32>} : memref<2x32x64xf32, #tpu.memory_space<vmem>>, vector<2x32x64xf32>,
    %c0_i32_9 = arith.constant 0 : i32
    %7 = arith.cmpi eq, %arg1, %c0_i32_9 : i32
    %8 = arith.extui %7 : i1 to i32
    %c0_i32_10 = arith.constant 0 : i32
    %9 = arith.cmpi ne, %8, %c0_i32_10 : i32
    scf.if %9 {
      %c0_11 = arith.constant 0 : index
      %c0_12 = arith.constant 0 : index
      %c0_13 = arith.constant 0 : index
      %10 = vector.load %arg8[%c0_11, %c0_12, %c0_13] : memref<2x32x64xf32, #tpu.memory_space<vmem>>, vector<2x32x64xf32>
      %cst = arith.constant dense<0.000000e+00> : vector<2x32xf32>
      %11 = vector.multi_reduction <add>, %10, %cst [2] : vector<2x32x64xf32> to vector<2x32xf32>
      %cst_14 = arith.constant 1.562500e-02 : f32
      %12 = vector.broadcast %cst_14 : f32 to vector<2x32xf32>
      %13 = arith.mulf %11, %12 : vector<2x32xf32>
      %c0_15 = arith.constant 0 : index
      %c0_16 = arith.constant 0 : index
      %14 = vector.load %arg3[%c0_15, %c0_16] : memref<32x256xf32, #tpu.memory_space<vmem>>, vector<32x256xf32>
      %cst_17 = arith.constant dense<0.000000e+00> : vector<2x256xf32>
      %15 = tpu.matmul %13, %14, %cst_17 {dimension_numbers = #tpu.dot_dimension_numbers<[1], [0], [0], [1], [0, 0, 1, 1], [], []>} : vector<2x32xf32>, vector<32x256xf32>, vector<2x256xf32> -> vector<2x256xf32>
      %c0_18 = arith.constant 0 : index
      %c0_19 = arith.constant 0 : index
      %16 = vector.load %arg4[%c0_18, %c0_19] : memref<1x256xf32, #tpu.memory_space<vmem>>, vector<1x256xf32>
      %17 = vector.broadcast %16 : vector<1x256xf32> to vector<2x256xf32>
      %18 = arith.addf %15, %17 : vector<2x256xf32>
      %cst_20 = arith.constant 0.000000e+00 : f32
      %19 = vector.broadcast %cst_20 : f32 to vector<2x256xf32>
      %20 = arith.cmpf oge, %18, %19 : vector<2x256xf32>
      %cst_21 = arith.constant 0.00999999977 : f32
      %21 = vector.broadcast %cst_21 : f32 to vector<2x256xf32>
      %22 = arith.mulf %21, %18 : vector<2x256xf32>
      %23 = arith.select %20, %18, %22 : vector<2x256xi1>, vector<2x256xf32>
      %c0_22 = arith.constant 0 : index
      %c0_23 = arith.constant 0 : index
      %24 = vector.load %arg5[%c0_22, %c0_23] : memref<256x128xf32, #tpu.memory_space<vmem>>, vector<256x128xf32>
      %cst_24 = arith.constant dense<0.000000e+00> : vector<2x128xf32>
      %25 = tpu.matmul %23, %24, %cst_24 {dimension_numbers = #tpu.dot_dimension_numbers<[1], [0], [0], [1], [0, 0, 1, 1], [], []>} : vector<2x256xf32>, vector<256x128xf32>, vector<2x128xf32> -> vector<2x128xf32>
      %c0_25 = arith.constant 0 : index
      %c0_26 = arith.constant 0 : index
      %26 = vector.load %arg6[%c0_25, %c0_26] : memref<1x128xf32, #tpu.memory_space<vmem>>, vector<1x128xf32>
      %27 = vector.broadcast %26 : vector<1x128xf32> to vector<2x128xf32>
      %28 = arith.addf %25, %27 : vector<2x128xf32>
      %cst_27 = arith.constant 0.000000e+00 : f32
      %29 = vector.broadcast %cst_27 : f32 to vector<2x128xf32>
      %30 = arith.cmpf oge, %28, %29 : vector<2x128xf32>
      %cst_28 = arith.constant 0.00999999977 : f32
      %31 = vector.broadcast %cst_28 : f32 to vector<2x128xf32>
      %32 = arith.mulf %31, %28 : vector<2x128xf32>
      %33 = arith.select %30, %28, %32 : vector<2x128xi1>, vector<2x128xf32>
      %c0_29 = arith.constant 0 : index
      %c0_30 = arith.constant 0 : index
      %34 = vector.load %arg7[%c0_29, %c0_30] : memref<2x128xf32, #tpu.memory_space<vmem>>, vector<2x128xf32>
      tpu.vector_store %arg7[%c0_29, %c0_30], %33 {strides = array<i32>} : memref<2x128xf32, #tpu.memory_space<vmem>>, vector<2x128xf32>,
    } else {
    }
    return
  }
  func.func @transform_0(%arg0: i32, %arg1: i32) -> (i32, i32, i32) {
    %c0_i32 = arith.constant 0 : i32
    %c0_i32_0 = arith.constant 0 : i32
    return %arg0, %c0_i32, %arg1 : i32, i32, i32
  }
  func.func @transform_1(%arg0: i32, %arg1: i32) -> (i32, i32) {
    %c0_i32 = arith.constant 0 : i32
    %c0_i32_0 = arith.constant 0 : i32
    %c0_i32_1 = arith.constant 0 : i32
    return %c0_i32, %c0_i32_0 : i32, i32
  }
  func.func @transform_2(%arg0: i32, %arg1: i32) -> (i32, i32) {
    %c0_i32 = arith.constant 0 : i32
    %c0_i32_0 = arith.constant 0 : i32
    %c0_i32_1 = arith.constant 0 : i32
    return %c0_i32, %c0_i32_0 : i32, i32
  }
  func.func @transform_3(%arg0: i32, %arg1: i32) -> (i32, i32) {
    %c0_i32 = arith.constant 0 : i32
    %c0_i32_0 = arith.constant 0 : i32
    %c0_i32_1 = arith.constant 0 : i32
    return %c0_i32, %c0_i32_0 : i32, i32
  }
  func.func @transform_4(%arg0: i32, %arg1: i32) -> (i32, i32) {
    %c0_i32 = arith.constant 0 : i32
    %c0_i32_0 = arith.constant 0 : i32
    %c0_i32_1 = arith.constant 0 : i32
    return %c0_i32, %c0_i32_0 : i32, i32
  }
  func.func @transform_5(%arg0: i32, %arg1: i32) -> (i32, i32) {
    %c0_i32 = arith.constant 0 : i32
    %c0_i32_0 = arith.constant 0 : i32
    return %arg0, %c0_i32 : i32, i32
  }
}

</mosaic_0001>

<llo_original>
// kernel: classifier_forward.1
$region0: #{classifier_forward.1}
  #allocation0 [shape = 'u32[]', space=smem, size = 0x4, offset = 0x4, fixed_abs, tag = 'smem constant byte address 0x4 - core index']
  #allocation1 [shape = 'u32[144,128]{1,0:T(1,128)}', space=vmem, size = 0x12000, scoped, tag = 'internal scratch']
  #allocation2 [shape = 'f32[2,32,64]{2,1,0:T(8,128)}', space=vmem, size = 0x8000, scoped, tag = 'scratch operand']
  %s0 = inlined_call_operand.vmem [shape: f32[2,32,64], index: 0, kind: input, shape index: {}]
  %s1 = inlined_call_operand.vmem [shape: f32[32,256], index: 1, kind: input, shape index: {}]
  %s2 = inlined_call_operand.vmem [shape: f32[1,256], index: 2, kind: input, shape index: {}]
  %s3 = inlined_call_operand.vmem [shape: f32[256,128], index: 3, kind: input, shape index: {}]
  %s4 = inlined_call_operand.vmem [shape: f32[1,128], index: 4, kind: input, shape index: {}]
  %s5 = inlined_call_operand.vmem [shape: f32[2,128], index: 5, kind: output, shape index: {}]
  %s6 = sld [smem:[#allocation0]]
  $region38: #{classifier_forward.1} parent=0
    _
  %s8 = ssub.s32 1, %s6
  %s9 = scalar_select 0, %s8, %s6
  // Predicated region
  $region2: #{classifier_forward.1} parent=0 // pred_check
    _
  $region3: #{classifier_forward.1} parent=0 // pred_check_branch
    %11 = sbr.rel (0) target = $region5
  $region4: #{classifier_forward.1} parent=0 // pred_region
    _
  $region5: #{classifier_forward.1} parent=0 // pred_fallthru
    _
  // Predicated region
  $region6: #{classifier_forward.1} parent=0 // pred_check
    _
  $region7: #{classifier_forward.1} parent=0 // pred_check_branch
    %13 = sbr.rel (0) target = $region9
  $region8: #{classifier_forward.1} parent=0 // pred_region
    _
  $region9: #{classifier_forward.1} parent=0 // pred_fallthru
    _
  // Predicated region
  $region10: #{classifier_forward.1} parent=0 // pred_check
    _
  $region11: #{classifier_forward.1} parent=0 // pred_check_branch
    %15 = sbr.rel (0) target = $region13
  $region12: #{classifier_forward.1} parent=0 // pred_region
    _
  $region13: #{classifier_forward.1} parent=0 // pred_fallthru
    _
  // Predicated region
  $region14: #{classifier_forward.1} parent=0 // pred_check
    _
  $region15: #{classifier_forward.1} parent=0 // pred_check_branch
    %17 = sbr.rel (0) target = $region17
  $region16: #{classifier_forward.1} parent=0 // pred_region
    _
  $region17: #{classifier_forward.1} parent=0 // pred_fallthru
    _
  // Predicated region
  $region18: #{classifier_forward.1} parent=0 // pred_check
    _
  $region19: #{classifier_forward.1} parent=0 // pred_check_branch
    %19 = sbr.rel (0) target = $region21
  $region20: #{classifier_forward.1} parent=0 // pred_region
    _
  $region21: #{classifier_forward.1} parent=0 // pred_fallthru
    _
  %p20 = scmp.eq.s32.totalorder 0, 0
  // Predicated region
  $region22: #{classifier_forward.1} parent=0 // pred_check
    %p21 = pneg %p20
  $region23: #{classifier_forward.1} parent=0 // pred_check_branch
    %23 = sbr.rel (%p21) target = $region25
  $region24: #{classifier_forward.1} parent=0 // pred_region
    %vm24 = vcmask 523264
    %25 = vst.msk [vmem:[#allocation2] sm:$0xff] %vm24, 0.0
    %26 = vst.msk [vmem:[#allocation2 + $0x8] sm:$0xff] %vm24, 0.0
    %27 = vst.msk [vmem:[#allocation2 + $0x10] sm:$0xff] %vm24, 0.0
    %28 = vst.msk [vmem:[#allocation2 + $0x18] sm:$0xff] %vm24, 0.0
    %29 = vst.msk [vmem:[#allocation2 + $0x20] sm:$0xff] %vm24, 0.0
    %30 = vst.msk [vmem:[#allocation2 + $0x28] sm:$0xff] %vm24, 0.0
    %31 = vst.msk [vmem:[#allocation2 + $0x30] sm:$0xff] %vm24, 0.0
    %32 = vst.msk [vmem:[#allocation2 + $0x38] sm:$0xff] %vm24, 0.0
  $region25: #{classifier_forward.1} parent=0 // pred_fallthru
    _
  %v33 = vld [vmem:[#allocation2] sm:$0xff]
  %v34 = vld [vmem:[#allocation2 + $0x8] sm:$0xff]
  %v35 = vld [vmem:[#allocation2 + $0x10] sm:$0xff]
  %v36 = vld [vmem:[#allocation2 + $0x18] sm:$0xff]
  %v37 = vld [vmem:[#allocation2 + $0x20] sm:$0xff]
  %v38 = vld [vmem:[#allocation2 + $0x28] sm:$0xff]
  %v39 = vld [vmem:[#allocation2 + $0x30] sm:$0xff]
  %v40 = vld [vmem:[#allocation2 + $0x38] sm:$0xff]
  %v41 = vld [vmem:[%s0] sm:$0xff]
  %v42 = vld [vmem:[%s0 + $0x8] sm:$0xff]
  %v43 = vld [vmem:[%s0 + $0x10] sm:$0xff]
  %v44 = vld [vmem:[%s0 + $0x18] sm:$0xff]
  %v45 = vld [vmem:[%s0 + $0x20] sm:$0xff]
  %v46 = vld [vmem:[%s0 + $0x28] sm:$0xff]
  %v47 = vld [vmem:[%s0 + $0x30] sm:$0xff]
  %v48 = vld [vmem:[%s0 + $0x38] sm:$0xff]
  %v49 = vadd.f32 %v33, %v41
  %v50 = vadd.f32 %v34, %v42
  %v51 = vadd.f32 %v35, %v43
  %v52 = vadd.f32 %v36, %v44
  %v53 = vadd.f32 %v37, %v45
  %v54 = vadd.f32 %v38, %v46
  %v55 = vadd.f32 %v39, %v47
  %v56 = vadd.f32 %v40, %v48
  %vm57 = vcmask 523264
  %58 = vst.msk [vmem:[#allocation2] sm:$0xff] %vm57, %v49
  %59 = vst.msk [vmem:[#allocation2 + $0x8] sm:$0xff] %vm57, %v50
  %60 = vst.msk [vmem:[#allocation2 + $0x10] sm:$0xff] %vm57, %v51
  %61 = vst.msk [vmem:[#allocation2 + $0x18] sm:$0xff] %vm57, %v52
  %62 = vst.msk [vmem:[#allocation2 + $0x20] sm:$0xff] %vm57, %v53
  %63 = vst.msk [vmem:[#allocation2 + $0x28] sm:$0xff] %vm57, %v54
  %64 = vst.msk [vmem:[#allocation2 + $0x30] sm:$0xff] %vm57, %v55
  %65 = vst.msk [vmem:[#allocation2 + $0x38] sm:$0xff] %vm57, %v56
  // Predicated region
  $region26: #{classifier_forward.1} parent=0 // pred_check
    %p66 = pneg %p20
  $region27: #{classifier_forward.1} parent=0 // pred_check_branch
    %68 = sbr.rel (%p66) target = $region29
  $region28: #{classifier_forward.1} parent=0 // pred_region
    %v69 = vld [vmem:[#allocation2] sm:$0xff]
    %v70 = vld [vmem:[#allocation2 + $0x8] sm:$0xff]
    %v71 = vld [vmem:[#allocation2 + $0x10] sm:$0xff]
    %v72 = vld [vmem:[#allocation2 + $0x18] sm:$0xff]
    %v73 = vld [vmem:[#allocation2 + $0x20] sm:$0xff]
    %v74 = vld [vmem:[#allocation2 + $0x28] sm:$0xff]
    %v75 = vld [vmem:[#allocation2 + $0x30] sm:$0xff]
    %v76 = vld [vmem:[#allocation2 + $0x38] sm:$0xff]
    %v77 = vsel %vm57, %v69, 0.0
    %78 = vadd.xlane.f32.xlu0 %v77
    %v79 = vpop.xlane.xlu0 %78
    %v80 = vsel %vm57, %v70, 0.0
    %81 = vadd.xlane.f32.xlu0 %v80
    %v82 = vpop.xlane.xlu0 %81
    %v83 = vsel %vm57, %v71, 0.0
    %84 = vadd.xlane.f32.xlu0 %v83
    %v85 = vpop.xlane.xlu0 %84
    %v86 = vsel %vm57, %v72, 0.0
    %87 = vadd.xlane.f32.xlu0 %v86
    %v88 = vpop.xlane.xlu0 %87
    %v89 = vsel %vm57, %v73, 0.0
    %90 = vadd.xlane.f32.xlu0 %v89
    %v91 = vpop.xlane.xlu0 %90
    %v92 = vsel %vm57, %v74, 0.0
    %93 = vadd.xlane.f32.xlu0 %v92
    %v94 = vpop.xlane.xlu0 %93
    %v95 = vsel %vm57, %v75, 0.0
    %96 = vadd.xlane.f32.xlu0 %v95
    %v97 = vpop.xlane.xlu0 %96
    %v98 = vsel %vm57, %v76, 0.0
    %99 = vadd.xlane.f32.xlu0 %v98
    %v100 = vpop.xlane.xlu0 %99
    %v101 = vmul.f32 %v79, 0.015625
    %v102 = vmul.f32 %v82, 0.015625
    %v103 = vmul.f32 %v85, 0.015625
    %v104 = vmul.f32 %v88, 0.015625
    %v105 = vmul.f32 %v91, 0.015625
    %v106 = vmul.f32 %v94, 0.015625
    %v107 = vmul.f32 %v97, 0.015625
    %v108 = vmul.f32 %v100, 0.015625
    %v109 = vld [vmem:[%s1] sm:$0xff]
    %v110 = vld [vmem:[%s1 + $0x8] sm:$0xff]
    %v111 = vld [vmem:[%s1 + $0x10] sm:$0xff]
    %v112 = vld [vmem:[%s1 + $0x18] sm:$0xff]
    %v113 = vld [vmem:[%s1 + $0x20] sm:$0xff]
    %v114 = vld [vmem:[%s1 + $0x28] sm:$0xff]
    %v115 = vld [vmem:[%s1 + $0x30] sm:$0xff]
    %v116 = vld [vmem:[%s1 + $0x38] sm:$0xff]
    %v117 = vld [vmem:[%s2] sm:$0x3]
    %v119 = vlaneseq
    %v120 = vshrl.u32 %v119, 7
    %v121 = vsub.s32 0, %v120
    %v122 = vrot.slane %v117, %v121
    %v123 = vlaneseq
    %v124 = vshrl.u32 %v123, 7
    %v125 = vsub.s32 1, %v124
    %v126 = vrot.slane %v117, %v125
    %v137 = vlaneseq
    %v138 = vand.u32 %v137, 127
    %v139 = vlaneseq
    %v140 = vshrl.u32 %v139, 7
    %v141 = vsub.s32 %v138, %v140
    %v142 = vrot.slane %v101, %v141
    %v143 = vadd.s32 %v138, 4294967288
    %v144 = vlaneseq
    %v145 = vshrl.u32 %v144, 7
    %v146 = vsub.s32 %v143, %v145
    %v147 = vrot.slane %v102, %v146
    %vm148 = vcmask 130112
    %v149 = vsel %vm148, %v147, %v142
    %v150 = vadd.s32 %v138, 4294967280
    %v151 = vlaneseq
    %v152 = vshrl.u32 %v151, 7
    %v153 = vsub.s32 %v150, %v152
    %v154 = vrot.slane %v103, %v153
    %vm155 = vcmask 195712
    %v156 = vsel %vm155, %v154, %v149
    %v157 = vadd.s32 %v138, 4294967272
    %v158 = vlaneseq
    %v159 = vshrl.u32 %v158, 7
    %v160 = vsub.s32 %v157, %v159
    %v161 = vrot.slane %v104, %v160
    %vm162 = vcmask 261312
    %v163 = vsel %vm162, %v161, %v156
    %v164 = vlaneseq
    %v165 = vshrl.u32 %v164, 7
    %v166 = vsub.s32 %v138, %v165
    %v167 = vrot.slane %v105, %v166
    %v168 = vlaneseq
    %v169 = vshrl.u32 %v168, 7
    %v170 = vsub.s32 %v143, %v169
    %v171 = vrot.slane %v106, %v170
    %v172 = vsel %vm148, %v171, %v167
    %v173 = vlaneseq
    %v174 = vshrl.u32 %v173, 7
    %v175 = vsub.s32 %v150, %v174
    %v176 = vrot.slane %v107, %v175
    %v177 = vsel %vm155, %v176, %v172
    %v178 = vlaneseq
    %v179 = vshrl.u32 %v178, 7
    %v180 = vsub.s32 %v157, %v179
    %v181 = vrot.slane %v108, %v180
    %v182 = vsel %vm162, %v181, %v177
    %vm183 = vcmask 1041409
    %v184 = vsel %vm183, %v182, %v163
    %vm185 = vcmask 261120
    %v186 = vsel %vm185, %v184, 0
    %188 = vmatprep.subr.mxu0 %v110
    %189 = vmatpush1.msra.mxu0 %v109
    %190 = vmatprep.subr.mxu0 %v112
    %191 = vmatpush1.msra.mxu0 %v111
    %192 = vmatprep.subr.mxu0 %v114
    %193 = vmatpush1.msra.mxu0 %v113
    %194 = vmatprep.subr.mxu0 %v116
    %195 = vmatpush1.msra.mxu0 %v115
    %196 = vmatprep.subr.mxu0 0.0
    %197 = vmatpush1.msra.mxu0 0.0
    %198 = vmatprep.subr.mxu0 0.0
    %199 = vmatpush1.msra.mxu0 0.0
    %200 = vmatprep.subr.mxu0 0.0
    %201 = vmatpush1.msra.mxu0 0.0
    %202 = vmatprep.subr.mxu0 0.0
    %203 = vmatpush1.msra.mxu0 0.0
    %204 = vmatprep.subr.mxu0 0.0
    %205 = vmatpush1.msra.mxu0 0.0
    %206 = vmatprep.subr.mxu0 0.0
    %207 = vmatpush1.msra.mxu0 0.0
    %208 = vmatprep.subr.mxu0 0.0
    %209 = vmatpush1.msra.mxu0 0.0
    %210 = vmatprep.subr.mxu0 0.0
    %211 = vmatpush1.msra.mxu0 0.0
    %212 = vmatprep.subr.mxu0 0.0
    %213 = vmatpush1.msra.mxu0 0.0
    %214 = vmatprep.subr.mxu0 0.0
    %215 = vmatpush1.msra.mxu0 0.0
    %216 = vmatprep.subr.mxu0 0.0
    %217 = vmatpush1.msra.mxu0 0.0
    %218 = vmatprep.subr.mxu0 0.0
    %219 = vmatpush1.msra.mxu0 0.0
    %220 = vmatprep.subr.mxu0 0.0
    %221 = vmatpush1.msra.mxu0 0.0
    %222 = vmatprep.subr.mxu0 0.0
    %223 = vmatpush1.msra.mxu0 0.0
    %224 = vmatprep.subr.mxu0 0.0
    %225 = vmatpush1.msra.mxu0 0.0
    %226 = vmatprep.subr.mxu0 0.0
    %227 = vmatpush1.msra.mxu0 0.0
    %228 = vmatprep.subr.mxu0 0.0
    %229 = vmatpush1.msra.mxu0 0.0
    %230 = vmatprep.subr.mxu0 0.0
    %231 = vmatpush1.msra.mxu0 0.0
    %232 = vmatprep.subr.mxu0 0.0
    %233 = vmatpush1.msra.mxu0 0.0
    %234 = vmatprep.subr.mxu0 0.0
    %235 = vmatpush1.msra.mxu0 0.0
    %236 = vmatprep.subr.mxu0 0.0
    %237 = vmatpush1.msra.mxu0 0.0
    %238 = vmatprep.subr.mxu0 0.0
    %239 = vmatpush1.msra.mxu0 0.0
    %240 = vmatprep.subr.mxu0 0.0
    %241 = vmatpush1.msra.mxu0 0.0
    %242 = vmatprep.subr.mxu0 0.0
    %243 = vmatpush1.msra.mxu0 0.0
    %244 = vmatprep.subr.mxu0 0.0
    %245 = vmatpush1.msra.mxu0 0.0
    %246 = vmatprep.subr.mxu0 0.0
    %247 = vmatpush1.msra.mxu0 0.0
    %248 = vmatprep.subr.mxu0 0.0
    %249 = vmatpush1.msra.mxu0 0.0
    %250 = vmatprep.subr.mxu0 0.0
    %251 = vmatpush1.msra.mxu0 0.0
    %252 = vmatprep.mubr.f32.mxu0 0.0
    %253 = vmatmul.mubr.f32.gmra.mrb[0].mxu0 %v186
    %v254 = vpop.f32.mrb[0].mxu0
    %v255 = vadd.f32 %v122, %v254
    %v256 = vpop.f32.mrb[0].mxu0
    %v257 = vadd.f32 %v126, %v256
    %258 = vdwg.mxu0
    %vm259 = vcmp.ge.f32.partialorder %v255, 0.0
    %vm260 = vcmp.ge.f32.partialorder %v257, 0.0
    %v261 = vmul.f32 %v255, 0.01
    %v262 = vmul.f32 %v257, 0.01
    %v263 = vsel %vm259, %v255, %v261
    %v264 = vsel %vm260, %v257, %v262
    %v265 = vld [vmem:[%s3] sm:$0xff]
    %v266 = vld [vmem:[%s3 + $0x8] sm:$0xff]
    %v267 = vld [vmem:[%s3 + $0x10] sm:$0xff]
    %v268 = vld [vmem:[%s3 + $0x18] sm:$0xff]
    %v269 = vld [vmem:[%s3 + $0x20] sm:$0xff]
    %v270 = vld [vmem:[%s3 + $0x28] sm:$0xff]
    %v271 = vld [vmem:[%s3 + $0x30] sm:$0xff]
    %v272 = vld [vmem:[%s3 + $0x38] sm:$0xff]
    %v273 = vld [vmem:[%s3 + $0x40] sm:$0xff]
    %v274 = vld [vmem:[%s3 + $0x48] sm:$0xff]
    %v275 = vld [vmem:[%s3 + $0x50] sm:$0xff]
    %v276 = vld [vmem:[%s3 + $0x58] sm:$0xff]
    %v277 = vld [vmem:[%s3 + $0x60] sm:$0xff]
    %v278 = vld [vmem:[%s3 + $0x68] sm:$0xff]
    %v279 = vld [vmem:[%s3 + $0x70] sm:$0xff]
    %v280 = vld [vmem:[%s3 + $0x78] sm:$0xff]
    %v281 = vld [vmem:[%s3 + $0x80] sm:$0xff]
    %v282 = vld [vmem:[%s3 + $0x88] sm:$0xff]
    %v283 = vld [vmem:[%s3 + $0x90] sm:$0xff]
    %v284 = vld [vmem:[%s3 + $0x98] sm:$0xff]
    %v285 = vld [vmem:[%s3 + $0xa0] sm:$0xff]
    %v286 = vld [vmem:[%s3 + $0xa8] sm:$0xff]
    %v287 = vld [vmem:[%s3 + $0xb0] sm:$0xff]
    %v288 = vld [vmem:[%s3 + $0xb8] sm:$0xff]
    %v289 = vld [vmem:[%s3 + $0xc0] sm:$0xff]
    %v290 = vld [vmem:[%s3 + $0xc8] sm:$0xff]
    %v291 = vld [vmem:[%s3 + $0xd0] sm:$0xff]
    %v292 = vld [vmem:[%s3 + $0xd8] sm:$0xff]
    %v293 = vld [vmem:[%s3 + $0xe0] sm:$0xff]
    %v294 = vld [vmem:[%s3 + $0xe8] sm:$0xff]
    %v295 = vld [vmem:[%s3 + $0xf0] sm:$0xff]
    %v296 = vld [vmem:[%s3 + $0xf8] sm:$0xff]
    %v297 = vld [vmem:[%s4] sm:$0x1]
    %v299 = vlaneseq
    %v300 = vshrl.u32 %v299, 7
    %v301 = vsub.s32 0, %v300
    %v302 = vrot.slane %v297, %v301
    %304 = vmatprep.subr.mxu0 0.0
    %305 = vmatpush1.msra.mxu0 %v265
    %306 = vmatprep.subr.mxu0 0.0
    %307 = vmatpush1.msra.mxu0 %v266
    %308 = vmatprep.subr.mxu0 0.0
    %309 = vmatpush1.msra.mxu0 %v267
    %310 = vmatprep.subr.mxu0 0.0
    %311 = vmatpush1.msra.mxu0 %v268
    %312 = vmatprep.subr.mxu0 0.0
    %313 = vmatpush1.msra.mxu0 %v269
    %314 = vmatprep.subr.mxu0 0.0
    %315 = vmatpush1.msra.mxu0 %v270
    %316 = vmatprep.subr.mxu0 0.0
    %317 = vmatpush1.msra.mxu0 %v271
    %318 = vmatprep.subr.mxu0 0.0
    %319 = vmatpush1.msra.mxu0 %v272
    %320 = vmatprep.subr.mxu0 0.0
    %321 = vmatpush1.msra.mxu0 %v273
    %322 = vmatprep.subr.mxu0 0.0
    %323 = vmatpush1.msra.mxu0 %v274
    %324 = vmatprep.subr.mxu0 0.0
    %325 = vmatpush1.msra.mxu0 %v275
    %326 = vmatprep.subr.mxu0 0.0
    %327 = vmatpush1.msra.mxu0 %v276
    %328 = vmatprep.subr.mxu0 0.0
    %329 = vmatpush1.msra.mxu0 %v277
    %330 = vmatprep.subr.mxu0 0.0
    %331 = vmatpush1.msra.mxu0 %v278
    %332 = vmatprep.subr.mxu0 0.0
    %333 = vmatpush1.msra.mxu0 %v279
    %334 = vmatprep.subr.mxu0 0.0
    %335 = vmatpush1.msra.mxu0 %v280
    %336 = vmatprep.subr.mxu0 0.0
    %337 = vmatpush1.msra.mxu0 %v281
    %338 = vmatprep.subr.mxu0 0.0
    %339 = vmatpush1.msra.mxu0 %v282
    %340 = vmatprep.subr.mxu0 0.0
    %341 = vmatpush1.msra.mxu0 %v283
    %342 = vmatprep.subr.mxu0 0.0
    %343 = vmatpush1.msra.mxu0 %v284
    %344 = vmatprep.subr.mxu0 0.0
    %345 = vmatpush1.msra.mxu0 %v285
    %346 = vmatprep.subr.mxu0 0.0
    %347 = vmatpush1.msra.mxu0 %v286
    %348 = vmatprep.subr.mxu0 0.0
    %349 = vmatpush1.msra.mxu0 %v287
    %350 = vmatprep.subr.mxu0 0.0
    %351 = vmatpush1.msra.mxu0 %v288
    %352 = vmatprep.subr.mxu0 0.0
    %353 = vmatpush1.msra.mxu0 %v289
    %354 = vmatprep.subr.mxu0 0.0
    %355 = vmatpush1.msra.mxu0 %v290
    %356 = vmatprep.subr.mxu0 0.0
    %357 = vmatpush1.msra.mxu0 %v291
    %358 = vmatprep.subr.mxu0 0.0
    %359 = vmatpush1.msra.mxu0 %v292
    %360 = vmatprep.subr.mxu0 0.0
    %361 = vmatpush1.msra.mxu0 %v293
    %362 = vmatprep.subr.mxu0 0.0
    %363 = vmatpush1.msra.mxu0 %v294
    %364 = vmatprep.subr.mxu0 0.0
    %365 = vmatpush1.msra.mxu0 %v295
    %366 = vmatprep.subr.mxu0 0.0
    %367 = vmatpush1.msra.mxu0 %v296
    %368 = vmatprep.mubr.f32.mxu0 %v264
    %369 = vmatmul.mubr.f32.gmra.mrb[0].mxu0 %v263
    %v370 = vpop.f32.mrb[0].mxu0
    %v371 = vadd.f32 %v302, %v370
    %v372 = vpop.f32.mrb[0].mxu0
    %373 = vdwg.mxu0
    %vm374 = vcmp.ge.f32.partialorder %v371, 0.0
    %v375 = vmul.f32 %v371, 0.01
    %v376 = vsel %vm374, %v371, %v375
    %377 = vst [vmem:[%s5] sm:$0x3] %v376
  $region29: #{classifier_forward.1} parent=0 // pred_fallthru
    _
  // Predicated region
  $region30: #{classifier_forward.1} parent=0 // pred_check
    _
  $region31: #{classifier_forward.1} parent=0 // pred_check_branch
    %379 = sbr.rel (0) target = $region33
  $region32: #{classifier_forward.1} parent=0 // pred_region
    _
  $region33: #{classifier_forward.1} parent=0 // pred_fallthru
    _
  // Predicated region
  $region34: #{classifier_forward.1} parent=0 // pred_check
    _
  $region35: #{classifier_forward.1} parent=0 // pred_check_branch
    %381 = sbr.rel (0) target = $region37
  $region36: #{classifier_forward.1} parent=0 // pred_region
    _
  $region37: #{classifier_forward.1} parent=0 // pred_fallthru
    _

</llo_original>
